<compile_context>
chip_gen: v7x
topology: tpu7x:2x2x1
jax: 0.10.0
libtpu: 0.0.40
codegen_flags: <defaults>
</compile_context>

<pallas_src>
import functools

import numpy as np
import jax
import jax.numpy as jnp
from jax.experimental import pallas as pl
from jax.experimental.pallas import tpu as pltpu

EPS = 1e-5
KS = 3          # kernel size of the two main convs
LANE = 128      # TPU lane width
HALO = 16       # sublane-aligned halo for the bf16 conv2 scratch


def _round_up(a, b):
    return (a + b - 1) // b * b


def _bn_affine(x, g, b, inv_rows):
    """Training-mode BatchNorm over rows as a single-pass fused affine.

    sum / sum-of-squares in one traversal (E[x^2]-E[x]^2 cancellation is a
    non-issue at bf16-MXU precision), then one x*scale + shift pass.
    Padded lanes: x==0 -> var==0 -> scale = gamma(=0)*rsqrt(eps) = 0,
    shift = beta(=0) - 0, so padded lanes stay exactly zero.
    """
    s = jnp.sum(x, axis=0, keepdims=True)
    sq = jnp.sum(x * x, axis=0, keepdims=True)
    m = s * inv_rows
    v = jnp.maximum(sq * inv_rows - m * m, 0.0)
    scale = g * jax.lax.rsqrt(v + EPS)
    shift = b - m * scale
    return x * scale + shift


def resblock_kernel(x_ref, w1_ref, g1_ref, b1_ref, w2_ref, g2_ref, b2_ref,
                    *rest, stride, lo, use_idconv):
    if use_idconv:
        wid_ref, gid_ref, bid_ref, o_ref, h1p_ref = rest
    else:
        xid_ref, o_ref, h1p_ref = rest

    s = stride
    n = x_ref.shape[1]
    cip = x_ref.shape[-1]
    cfp = o_ref.shape[-1]
    rows = n * lo
    inv_rows = 1.0 / rows

    def tap(k):
        # conv-1 tap k: x_pad[:, t*stride + k, :] for t in [0, lo)
        return x_ref[k % s, :, pl.ds(k // s, lo), :]          # (n, lo, cip) bf16

    t1 = tap(1)  # also the 1x1 shortcut-conv input (ks=1, pad=0, same stride)

    # ---- conv1: 3 accumulating MXU dots (no lane-axis concat), f32 acc ----
    acc1 = jnp.dot(tap(0).reshape(rows, cip), w1_ref[0],
                   preferred_element_type=jnp.float32)
    acc1 += jnp.dot(t1.reshape(rows, cip), w1_ref[1],
                    preferred_element_type=jnp.float32)
    acc1 += jnp.dot(tap(2).reshape(rows, cip), w1_ref[2],
                    preferred_element_type=jnp.float32)
    h1 = jnp.maximum(_bn_affine(acc1, g1_ref[...], b1_ref[...], inv_rows), 0.0)

    # ---- conv2 (ks=3, stride=1, pad=1): aligned-halo scratch, 3 acc dots ----
    h1_bf = h1.astype(jnp.bfloat16)                            # (rows, cfp)
    h1_3d = h1_bf.reshape(n, lo, cfp)
    h1p_ref[:, pl.ds(HALO - 1, 1), :] = jnp.zeros((n, 1, cfp), jnp.bfloat16)
    h1p_ref[:, pl.ds(HALO, lo), :] = h1_3d                     # aligned interior store
    h1p_ref[:, pl.ds(HALO + lo, 1), :] = jnp.zeros((n, 1, cfp), jnp.bfloat16)
    u0 = h1p_ref[:, pl.ds(HALO - 1, lo), :].reshape(rows, cfp)  # h1[t-1] (0 at t=0)
    u2 = h1p_ref[:, pl.ds(HALO + 1, lo), :].reshape(rows, cfp)  # h1[t+1] (0 at t=lo-1)
    acc2 = jnp.dot(u0, w2_ref[0], preferred_element_type=jnp.float32)
    acc2 += jnp.dot(h1_bf, w2_ref[1], preferred_element_type=jnp.float32)
    acc2 += jnp.dot(u2, w2_ref[2], preferred_element_type=jnp.float32)
    h2 = _bn_affine(acc2, g2_ref[...], b2_ref[...], inv_rows)

    # ---- shortcut path ----
    if use_idconv:
        accid = jnp.dot(t1.reshape(rows, cip), wid_ref[...],
                        preferred_element_type=jnp.float32)
        hid = _bn_affine(accid, gid_ref[...], bid_ref[...], inv_rows)
    else:
        hid = xid_ref[...].reshape(rows, cfp)                  # original f32 input

    # ---- residual add + final ReLU ----
    o_ref[...] = jnp.maximum(h2 + hid, 0.0).reshape(n, lo, cfp)


def resblock_forward(x_ncl, p, stride):
    """x_ncl: (N, Ci, L) float32, PyTorch Conv1d layout. Returns (N, Cf, Lo)."""
    N, Ci, L = x_ncl.shape
    Cf = p["w1"].shape[-1]
    pad = (KS - 1) // 2
    Lo = (L + 2 * pad - KS) // stride + 1
    Cip = _round_up(Ci, LANE)
    Cfp = _round_up(Cf, LANE)
    Lpad = L + 2 * pad
    Ls = _round_up(Lpad, stride)
    Lh = Ls // stride
    use_idconv = not (Ci == Cf and stride == 1)

    # channels-last; pad L (conv halo + stride round-up) and C (lane density).
    x_nlc = jnp.transpose(x_ncl, (0, 2, 1)).astype(jnp.float32)
    x_p = jnp.pad(x_nlc, ((0, 0), (pad, pad + Ls - Lpad), (0, Cip - Ci)))
    # Split L into (Lh, stride) and move the parity axis to the front so VMEM
    # blocks stay (sublane=L, lane=C) dense; for stride==1 this is a free
    # reshape. The conv taps then become plain static ref slices in-kernel.
    xr = x_p.reshape(N, Lh, stride, Cip).transpose(2, 0, 1, 3).astype(jnp.bfloat16)

    # weights pre-padded, kept (KS, C, Cf) so the kernel slices one tap per dot.
    w1 = jnp.pad(p["w1"], ((0, 0), (0, Cip - Ci), (0, Cfp - Cf))).astype(jnp.bfloat16)
    w2 = jnp.pad(p["w2"], ((0, 0), (0, Cfp - Cf), (0, Cfp - Cf))).astype(jnp.bfloat16)

    def vec(v):  # BN gamma/beta stay f32; lane tail MUST stay zero-padded.
        return jnp.pad(v.reshape(1, Cf), ((0, 0), (0, Cfp - Cf))).astype(jnp.float32)

    g1, b1 = vec(p["g1"]), vec(p["b1"])
    g2, b2 = vec(p["g2"]), vec(p["b2"])

    operands = [xr, w1, g1, b1, w2, g2, b2]
    if use_idconv:
        wid = jnp.pad(p["wid"], ((0, Cip - Ci), (0, Cfp - Cf))).astype(jnp.bfloat16)
        operands += [wid, vec(p["gid"]), vec(p["bid"])]
    else:
        # identity shortcut: add the original f32 input (no bf16 downcast).
        xid = jnp.pad(x_nlc, ((0, 0), (0, 0), (0, Cfp - Ci)))   # (N, L==Lo, Cfp) f32
        operands += [xid]

    def full(a):
        return pl.BlockSpec(a.shape, lambda i, nd=a.ndim: (0,) * nd)

    in_specs = [full(a) for a in operands]

    # advisory cost estimate so XLA can overlap surrounding ops.
    rows = N * Lo
    flops = 2 * rows * Cfp * (KS * Cip + KS * Cfp + (Cip if use_idconv else 0)) \
        + 12 * rows * Cfp
    in_bytes = (stride * N * Lh * Cip * 2 + KS * Cip * Cfp * 2
                + KS * Cfp * Cfp * 2 + 6 * Cfp * 4
                + (Cip * Cfp * 2 + 2 * Cfp * 4 if use_idconv else N * L * Cfp * 4))
    bytes_accessed = in_bytes + rows * Cfp * 4

    # VMEM budget: double-buffered operands + output, halo scratch, f32/bf16
    # intermediates; clamped to ~85% of physical VMEM (v7x: ~54 MiB, v5e/v6e:
    # ~108 MiB) so Mosaic keeps headroom for internal scratch.
    interm = 6 * rows * Cfp * 4 + 4 * rows * max(Cip, Cfp) * 2
    scratch_b = N * (Lo + 2 * HALO) * Cfp * 2
    vmem_est = 2 * in_bytes + 2 * rows * Cfp * 4 + scratch_b + interm
    try:
        phys = int(pltpu.get_tpu_info().vmem_capacity_bytes)
    except Exception:
        phys = 64 * 2**20
    vmem_limit = int(min(int(phys * 0.85), max(32 * 2**20, 2 * vmem_est)))

    kern = functools.partial(resblock_kernel, stride=stride, lo=Lo,
                             use_idconv=use_idconv)

    out_nlc = pl.pallas_call(
        kern,
        out_shape=jax.ShapeDtypeStruct((N, Lo, Cfp), jnp.float32),
        grid_spec=pltpu.PrefetchScalarGridSpec(
            num_scalar_prefetch=0,
            grid=(1,),
            in_specs=in_specs,
            out_specs=pl.BlockSpec((N, Lo, Cfp), lambda i: (0, 0, 0)),
            scratch_shapes=[pltpu.VMEM((N, Lo + 2 * HALO, Cfp), jnp.bfloat16)],
        ),
        compiler_params=pltpu.CompilerParams(
            dimension_semantics=("arbitrary",),
            vmem_limit_bytes=vmem_limit),
        cost_estimate=pl.CostEstimate(
            flops=int(flops), transcendentals=3 * Cfp,
            bytes_accessed=int(bytes_accessed)),
    )(*operands)

    return jnp.transpose(out_nlc[:, :, :Cf], (0, 2, 1))  # back to (N, Cf, Lo)


# ----------------------- pure-JAX reference (for verification) -----------------------
def _conv1d_ref(x_ncl, w_kif, stride, pad):
    w_oih = jnp.transpose(w_kif, (2, 1, 0))  # (Cf, Ci, KS)
    return jax.lax.conv_general_dilated(
        x_ncl, w_oih, window_strides=(stride,), padding=[(pad, pad)],
        dimension_numbers=("NCH", "OIH", "NCH"))


def _bn_train_ref(x_ncl, gamma, beta):
    m = jnp.mean(x_ncl, axis=(0, 2), keepdims=True)
    v = jnp.mean((x_ncl - m) ** 2, axis=(0, 2), keepdims=True)
    return (x_ncl - m) * jax.lax.rsqrt(v + EPS) * gamma[None, :, None] + beta[None, :, None]


def resblock_ref(x, p, stride, use_idconv=True):
    h = _conv1d_ref(x, p["w1"], stride, 1)
    h = jax.nn.relu(_bn_train_ref(h, p["g1"], p["b1"]))
    h = _conv1d_ref(h, p["w2"], 1, 1)
    h = _bn_train_ref(h, p["g2"], p["b2"])
    if use_idconv:
        i = _conv1d_ref(x, p["wid"][None, :, :], stride, 0)
        i = _bn_train_ref(i, p["gid"], p["bid"])
    else:
        i = x
    return jax.nn.relu(h + i)


if __name__ == "__main__":
    def make_params(keys, Ci, Cf):
        return dict(
            w1=jax.random.normal(keys[0], (KS, Ci, Cf), jnp.float32) * 0.3,
            g1=jax.random.uniform(keys[1], (Cf,), jnp.float32, 0.5, 1.5),
            b1=jax.random.normal(keys[2], (Cf,), jnp.float32) * 0.1,
            w2=jax.random.normal(keys[3], (KS, Cf, Cf), jnp.float32) * 0.3,
            g2=jax.random.uniform(keys[4], (Cf,), jnp.float32, 0.5, 1.5),
            b2=jax.random.normal(keys[5], (Cf,), jnp.float32) * 0.1,
            wid=jax.random.normal(keys[6], (Ci, Cf), jnp.float32) * 0.3,
            gid=jax.random.uniform(keys[7], (Cf,), jnp.float32, 0.5, 1.5),
            bid=jax.random.normal(keys[8], (Cf,), jnp.float32) * 0.1,
        )

    # bf16 MXU inputs -> compare against the f32 reference with a loosened tol.
    TOL = 5e-2

    # case 1: ni != nf, stride=2 -> 1x1 id-conv shortcut active
    N, Ci, Cf, L, stride = 2, 4, 8, 16, 2
    ks_ = jax.random.split(jax.random.PRNGKey(0), 10)
    x = jax.random.normal(ks_[0], (N, Ci, L), jnp.float32)
    params = make_params(ks_[1:], Ci, Cf)
    out = jax.block_until_ready(resblock_forward(x, params, stride))
    ref = resblock_ref(x, params, stride)
    Lo = (L + 2 * 1 - KS) // stride + 1
    assert out.shape == (N, Cf, Lo)
    np.testing.assert_allclose(np.asarray(out), np.asarray(ref), rtol=TOL, atol=TOL)

    # case 2: ni == nf, stride=1 -> identity shortcut (f32 residual add)
    N2, C2, L2 = 2, 8, 16
    ks2 = jax.random.split(jax.random.PRNGKey(1), 10)
    x2 = jax.random.normal(ks2[0], (N2, C2, L2), jnp.float32)
    params2 = make_params(ks2[1:], C2, C2)
    out2 = jax.block_until_ready(resblock_forward(x2, params2, 1))
    ref2 = resblock_ref(x2, params2, 1, use_idconv=False)
    assert out2.shape == (N2, C2, L2)
    np.testing.assert_allclose(np.asarray(out2), np.asarray(ref2), rtol=TOL, atol=TOL)

    print("KERNEL_OK")
</pallas_src>

<mosaic_0001>
module attributes {stable_mosaic.version = 11 : i64} {
  func.func @resblock_kernel(%arg0: i32, %arg1: memref<2x2x9x128xbf16, #tpu.memory_space<vmem>>, %arg2: memref<3x128x128xbf16, #tpu.memory_space<vmem>>, %arg3: memref<1x128xf32, #tpu.memory_space<vmem>>, %arg4: memref<1x128xf32, #tpu.memory_space<vmem>>, %arg5: memref<3x128x128xbf16, #tpu.memory_space<vmem>>, %arg6: memref<1x128xf32, #tpu.memory_space<vmem>>, %arg7: memref<1x128xf32, #tpu.memory_space<vmem>>, %arg8: memref<128x128xbf16, #tpu.memory_space<vmem>>, %arg9: memref<1x128xf32, #tpu.memory_space<vmem>>, %arg10: memref<1x128xf32, #tpu.memory_space<vmem>>, %arg11: memref<2x8x128xf32, #tpu.memory_space<vmem>>, %arg12: memref<2x40x128xbf16, #tpu.memory_space<vmem>>) attributes {dimension_semantics = [#tpu.dimension_semantics<arbitrary>], iteration_bounds = array<i64: 1>, scalar_prefetch = 0 : i64, scratch_operands = 1 : i64, tpu.core_type = #tpu.core_type<tc>, window_params = [{pipeline_mode = #tpu.pipeline_mode<synchronous>, transform_indices = @transform_0, window_bounds = array<i64: 2, 2, 9, 128>}, {pipeline_mode = #tpu.pipeline_mode<synchronous>, transform_indices = @transform_1, window_bounds = array<i64: 3, 128, 128>}, {pipeline_mode = #tpu.pipeline_mode<synchronous>, transform_indices = @transform_2, window_bounds = array<i64: 1, 128>}, {pipeline_mode = #tpu.pipeline_mode<synchronous>, transform_indices = @transform_3, window_bounds = array<i64: 1, 128>}, {pipeline_mode = #tpu.pipeline_mode<synchronous>, transform_indices = @transform_4, window_bounds = array<i64: 3, 128, 128>}, {pipeline_mode = #tpu.pipeline_mode<synchronous>, transform_indices = @transform_5, window_bounds = array<i64: 1, 128>}, {pipeline_mode = #tpu.pipeline_mode<synchronous>, transform_indices = @transform_6, window_bounds = array<i64: 1, 128>}, {pipeline_mode = #tpu.pipeline_mode<synchronous>, transform_indices = @transform_7, window_bounds = array<i64: 128, 128>}, {pipeline_mode = #tpu.pipeline_mode<synchronous>, transform_indices = @transform_8, window_bounds = array<i64: 1, 128>}, {pipeline_mode = #tpu.pipeline_mode<synchronous>, transform_indices = @transform_9, window_bounds = array<i64: 1, 128>}, {pipeline_mode = #tpu.pipeline_mode<synchronous>, transform_indices = @transform_10, window_bounds = array<i64: 2, 8, 128>}]} {
    %c1 = arith.constant 1 : index
    %c0 = arith.constant 0 : index
    %c0_0 = arith.constant 0 : index
    %c0_1 = arith.constant 0 : index
    %0 = vector.load %arg1[%c1, %c0, %c0_0, %c0_1] : memref<2x2x9x128xbf16, #tpu.memory_space<vmem>>, vector<1x2x8x128xbf16>
    %1 = vector.shape_cast %0 : vector<1x2x8x128xbf16> to vector<2x8x128xbf16>
    %c0_2 = arith.constant 0 : index
    %c0_3 = arith.constant 0 : index
    %c0_4 = arith.constant 0 : index
    %c0_5 = arith.constant 0 : index
    %2 = vector.load %arg1[%c0_2, %c0_3, %c0_4, %c0_5] : memref<2x2x9x128xbf16, #tpu.memory_space<vmem>>, vector<1x2x8x128xbf16>
    %3 = vector.shape_cast %2 : vector<1x2x8x128xbf16> to vector<2x8x128xbf16>
    %4 = vector.shape_cast %3 : vector<2x8x128xbf16> to vector<16x128xbf16>
    %c0_6 = arith.constant 0 : index
    %c0_7 = arith.constant 0 : index
    %c0_8 = arith.constant 0 : index
    %5 = vector.load %arg2[%c0_6, %c0_7, %c0_8] : memref<3x128x128xbf16, #tpu.memory_space<vmem>>, vector<1x128x128xbf16>
    %6 = vector.shape_cast %5 : vector<1x128x128xbf16> to vector<128x128xbf16>
    %cst = arith.constant dense<0.000000e+00> : vector<16x128xf32>
    %7 = tpu.matmul %4, %6, %cst {dimension_numbers = #tpu.dot_dimension_numbers<[1], [0], [0], [1], [0, 0, 1, 1], [], []>} : vector<16x128xbf16>, vector<128x128xbf16>, vector<16x128xf32> -> vector<16x128xf32>
    %8 = vector.shape_cast %1 : vector<2x8x128xbf16> to vector<16x128xbf16>
    %c1_9 = arith.constant 1 : index
    %c0_10 = arith.constant 0 : index
    %c0_11 = arith.constant 0 : index
    %9 = vector.load %arg2[%c1_9, %c0_10, %c0_11] : memref<3x128x128xbf16, #tpu.memory_space<vmem>>, vector<1x128x128xbf16>
    %10 = vector.shape_cast %9 : vector<1x128x128xbf16> to vector<128x128xbf16>
    %cst_12 = arith.constant dense<0.000000e+00> : vector<16x128xf32>
    %11 = tpu.matmul %8, %10, %cst_12 {dimension_numbers = #tpu.dot_dimension_numbers<[1], [0], [0], [1], [0, 0, 1, 1], [], []>} : vector<16x128xbf16>, vector<128x128xbf16>, vector<16x128xf32> -> vector<16x128xf32>
    %12 = arith.addf %7, %11 : vector<16x128xf32>
    %c0_13 = arith.constant 0 : index
    %c0_14 = arith.constant 0 : index
    %c1_15 = arith.constant 1 : index
    %c0_16 = arith.constant 0 : index
    %13 = vector.load %arg1[%c0_13, %c0_14, %c1_15, %c0_16] : memref<2x2x9x128xbf16, #tpu.memory_space<vmem>>, vector<1x2x8x128xbf16>
    %14 = vector.shape_cast %13 : vector<1x2x8x128xbf16> to vector<2x8x128xbf16>
    %15 = vector.shape_cast %14 : vector<2x8x128xbf16> to vector<16x128xbf16>
    %c2 = arith.constant 2 : index
    %c0_17 = arith.constant 0 : index
    %c0_18 = arith.constant 0 : index
    %16 = vector.load %arg2[%c2, %c0_17, %c0_18] : memref<3x128x128xbf16, #tpu.memory_space<vmem>>, vector<1x128x128xbf16>
    %17 = vector.shape_cast %16 : vector<1x128x128xbf16> to vector<128x128xbf16>
    %cst_19 = arith.constant dense<0.000000e+00> : vector<16x128xf32>
    %18 = tpu.matmul %15, %17, %cst_19 {dimension_numbers = #tpu.dot_dimension_numbers<[1], [0], [0], [1], [0, 0, 1, 1], [], []>} : vector<16x128xbf16>, vector<128x128xbf16>, vector<16x128xf32> -> vector<16x128xf32>
    %19 = arith.addf %12, %18 : vector<16x128xf32>
    %c0_20 = arith.constant 0 : index
    %c0_21 = arith.constant 0 : index
    %20 = vector.load %arg3[%c0_20, %c0_21] : memref<1x128xf32, #tpu.memory_space<vmem>>, vector<1x128xf32>
    %c0_22 = arith.constant 0 : index
    %c0_23 = arith.constant 0 : index
    %21 = vector.load %arg4[%c0_22, %c0_23] : memref<1x128xf32, #tpu.memory_space<vmem>>, vector<1x128xf32>
    %cst_24 = arith.constant dense<0.000000e+00> : vector<128xf32>
    %22 = vector.multi_reduction <add>, %19, %cst_24 [0] : vector<16x128xf32> to vector<128xf32>
    %23 = vector.shape_cast %22 : vector<128xf32> to vector<1x128xf32>
    %24 = arith.mulf %19, %19 : vector<16x128xf32>
    %cst_25 = arith.constant dense<0.000000e+00> : vector<128xf32>
    %25 = vector.multi_reduction <add>, %24, %cst_25 [0] : vector<16x128xf32> to vector<128xf32>
    %26 = vector.shape_cast %25 : vector<128xf32> to vector<1x128xf32>
    %cst_26 = arith.constant 6.250000e-02 : f32
    %27 = vector.broadcast %cst_26 : f32 to vector<1x128xf32>
    %28 = arith.mulf %23, %27 : vector<1x128xf32>
    %cst_27 = arith.constant 6.250000e-02 : f32
    %29 = vector.broadcast %cst_27 : f32 to vector<1x128xf32>
    %30 = arith.mulf %26, %29 : vector<1x128xf32>
    %31 = arith.mulf %28, %28 : vector<1x128xf32>
    %32 = arith.subf %30, %31 : vector<1x128xf32>
    %cst_28 = arith.constant 0.000000e+00 : f32
    %33 = vector.broadcast %cst_28 : f32 to vector<1x128xf32>
    %34 = arith.maximumf %32, %33 : vector<1x128xf32>
    %cst_29 = arith.constant 9.99999974E-6 : f32
    %35 = vector.broadcast %cst_29 : f32 to vector<1x128xf32>
    %36 = arith.addf %34, %35 : vector<1x128xf32>
    %37 = math.rsqrt %36 : vector<1x128xf32>
    %38 = arith.mulf %20, %37 : vector<1x128xf32>
    %39 = arith.mulf %28, %38 : vector<1x128xf32>
    %40 = arith.subf %21, %39 : vector<1x128xf32>
    %41 = vector.broadcast %38 : vector<1x128xf32> to vector<16x128xf32>
    %42 = arith.mulf %19, %41 : vector<16x128xf32>
    %43 = vector.broadcast %40 : vector<1x128xf32> to vector<16x128xf32>
    %44 = arith.addf %42, %43 : vector<16x128xf32>
    %cst_30 = arith.constant 0.000000e+00 : f32
    %45 = vector.broadcast %cst_30 : f32 to vector<16x128xf32>
    %46 = arith.maximumf %44, %45 : vector<16x128xf32>
    %47 = arith.truncf %46 : vector<16x128xf32> to vector<16x128xbf16>
    %48 = vector.shape_cast %47 : vector<16x128xbf16> to vector<2x8x128xbf16>
    %cst_31 = arith.constant 0.000000e+00 : bf16
    %49 = vector.broadcast %cst_31 : bf16 to vector<2x1x128xbf16>
    %c0_32 = arith.constant 0 : index
    %c15 = arith.constant 15 : index
    %c0_33 = arith.constant 0 : index
    %50 = vector.load %arg12[%c0_32, %c15, %c0_33] : memref<2x40x128xbf16, #tpu.memory_space<vmem>>, vector<2x1x128xbf16>
    tpu.vector_store %arg12[%c0_32, %c15, %c0_33], %49 {strides = array<i32>} : memref<2x40x128xbf16, #tpu.memory_space<vmem>>, vector<2x1x128xbf16>,
    %c0_34 = arith.constant 0 : index
    %c16 = arith.constant 16 : index
    %c0_35 = arith.constant 0 : index
    %51 = vector.load %arg12[%c0_34, %c16, %c0_35] : memref<2x40x128xbf16, #tpu.memory_space<vmem>>, vector<2x8x128xbf16>
    tpu.vector_store %arg12[%c0_34, %c16, %c0_35], %48 {strides = array<i32>} : memref<2x40x128xbf16, #tpu.memory_space<vmem>>, vector<2x8x128xbf16>,
    %cst_36 = arith.constant 0.000000e+00 : bf16
    %52 = vector.broadcast %cst_36 : bf16 to vector<2x1x128xbf16>
    %c0_37 = arith.constant 0 : index
    %c24 = arith.constant 24 : index
    %c0_38 = arith.constant 0 : index
    %53 = vector.load %arg12[%c0_37, %c24, %c0_38] : memref<2x40x128xbf16, #tpu.memory_space<vmem>>, vector<2x1x128xbf16>
    tpu.vector_store %arg12[%c0_37, %c24, %c0_38], %52 {strides = array<i32>} : memref<2x40x128xbf16, #tpu.memory_space<vmem>>, vector<2x1x128xbf16>,
    %c0_39 = arith.constant 0 : index
    %c15_40 = arith.constant 15 : index
    %c0_41 = arith.constant 0 : index
    %54 = vector.load %arg12[%c0_39, %c15_40, %c0_41] : memref<2x40x128xbf16, #tpu.memory_space<vmem>>, vector<2x8x128xbf16>
    %55 = vector.shape_cast %54 : vector<2x8x128xbf16> to vector<16x128xbf16>
    %c0_42 = arith.constant 0 : index
    %c17 = arith.constant 17 : index
    %c0_43 = arith.constant 0 : index
    %56 = vector.load %arg12[%c0_42, %c17, %c0_43] : memref<2x40x128xbf16, #tpu.memory_space<vmem>>, vector<2x8x128xbf16>
    %57 = vector.shape_cast %56 : vector<2x8x128xbf16> to vector<16x128xbf16>
    %c0_44 = arith.constant 0 : index
    %c0_45 = arith.constant 0 : index
    %c0_46 = arith.constant 0 : index
    %58 = vector.load %arg5[%c0_44, %c0_45, %c0_46] : memref<3x128x128xbf16, #tpu.memory_space<vmem>>, vector<1x128x128xbf16>
    %59 = vector.shape_cast %58 : vector<1x128x128xbf16> to vector<128x128xbf16>
    %cst_47 = arith.constant dense<0.000000e+00> : vector<16x128xf32>
    %60 = tpu.matmul %55, %59, %cst_47 {dimension_numbers = #tpu.dot_dimension_numbers<[1], [0], [0], [1], [0, 0, 1, 1], [], []>} : vector<16x128xbf16>, vector<128x128xbf16>, vector<16x128xf32> -> vector<16x128xf32>
    %c1_48 = arith.constant 1 : index
    %c0_49 = arith.constant 0 : index
    %c0_50 = arith.constant 0 : index
    %61 = vector.load %arg5[%c1_48, %c0_49, %c0_50] : memref<3x128x128xbf16, #tpu.memory_space<vmem>>, vector<1x128x128xbf16>
    %62 = vector.shape_cast %61 : vector<1x128x128xbf16> to vector<128x128xbf16>
    %cst_51 = arith.constant dense<0.000000e+00> : vector<16x128xf32>
    %63 = tpu.matmul %47, %62, %cst_51 {dimension_numbers = #tpu.dot_dimension_numbers<[1], [0], [0], [1], [0, 0, 1, 1], [], []>} : vector<16x128xbf16>, vector<128x128xbf16>, vector<16x128xf32> -> vector<16x128xf32>
    %64 = arith.addf %60, %63 : vector<16x128xf32>
    %c2_52 = arith.constant 2 : index
    %c0_53 = arith.constant 0 : index
    %c0_54 = arith.constant 0 : index
    %65 = vector.load %arg5[%c2_52, %c0_53, %c0_54] : memref<3x128x128xbf16, #tpu.memory_space<vmem>>, vector<1x128x128xbf16>
    %66 = vector.shape_cast %65 : vector<1x128x128xbf16> to vector<128x128xbf16>
    %cst_55 = arith.constant dense<0.000000e+00> : vector<16x128xf32>
    %67 = tpu.matmul %57, %66, %cst_55 {dimension_numbers = #tpu.dot_dimension_numbers<[1], [0], [0], [1], [0, 0, 1, 1], [], []>} : vector<16x128xbf16>, vector<128x128xbf16>, vector<16x128xf32> -> vector<16x128xf32>
    %68 = arith.addf %64, %67 : vector<16x128xf32>
    %c0_56 = arith.constant 0 : index
    %c0_57 = arith.constant 0 : index
    %69 = vector.load %arg6[%c0_56, %c0_57] : memref<1x128xf32, #tpu.memory_space<vmem>>, vector<1x128xf32>
    %c0_58 = arith.constant 0 : index
    %c0_59 = arith.constant 0 : index
    %70 = vector.load %arg7[%c0_58, %c0_59] : memref<1x128xf32, #tpu.memory_space<vmem>>, vector<1x128xf32>
    %cst_60 = arith.constant dense<0.000000e+00> : vector<128xf32>
    %71 = vector.multi_reduction <add>, %68, %cst_60 [0] : vector<16x128xf32> to vector<128xf32>
    %72 = vector.shape_cast %71 : vector<128xf32> to vector<1x128xf32>
    %73 = arith.mulf %68, %68 : vector<16x128xf32>
    %cst_61 = arith.constant dense<0.000000e+00> : vector<128xf32>
    %74 = vector.multi_reduction <add>, %73, %cst_61 [0] : vector<16x128xf32> to vector<128xf32>
    %75 = vector.shape_cast %74 : vector<128xf32> to vector<1x128xf32>
    %cst_62 = arith.constant 6.250000e-02 : f32
    %76 = vector.broadcast %cst_62 : f32 to vector<1x128xf32>
    %77 = arith.mulf %72, %76 : vector<1x128xf32>
    %cst_63 = arith.constant 6.250000e-02 : f32
    %78 = vector.broadcast %cst_63 : f32 to vector<1x128xf32>
    %79 = arith.mulf %75, %78 : vector<1x128xf32>
    %80 = arith.mulf %77, %77 : vector<1x128xf32>
    %81 = arith.subf %79, %80 : vector<1x128xf32>
    %cst_64 = arith.constant 0.000000e+00 : f32
    %82 = vector.broadcast %cst_64 : f32 to vector<1x128xf32>
    %83 = arith.maximumf %81, %82 : vector<1x128xf32>
    %cst_65 = arith.constant 9.99999974E-6 : f32
    %84 = vector.broadcast %cst_65 : f32 to vector<1x128xf32>
    %85 = arith.addf %83, %84 : vector<1x128xf32>
    %86 = math.rsqrt %85 : vector<1x128xf32>
    %87 = arith.mulf %69, %86 : vector<1x128xf32>
    %88 = arith.mulf %77, %87 : vector<1x128xf32>
    %89 = arith.subf %70, %88 : vector<1x128xf32>
    %90 = vector.broadcast %87 : vector<1x128xf32> to vector<16x128xf32>
    %91 = arith.mulf %68, %90 : vector<16x128xf32>
    %92 = vector.broadcast %89 : vector<1x128xf32> to vector<16x128xf32>
    %93 = arith.addf %91, %92 : vector<16x128xf32>
    %94 = vector.shape_cast %1 : vector<2x8x128xbf16> to vector<16x128xbf16>
    %c0_66 = arith.constant 0 : index
    %c0_67 = arith.constant 0 : index
    %95 = vector.load %arg8[%c0_66, %c0_67] : memref<128x128xbf16, #tpu.memory_space<vmem>>, vector<128x128xbf16>
    %cst_68 = arith.constant dense<0.000000e+00> : vector<16x128xf32>
    %96 = tpu.matmul %94, %95, %cst_68 {dimension_numbers = #tpu.dot_dimension_numbers<[1], [0], [0], [1], [0, 0, 1, 1], [], []>} : vector<16x128xbf16>, vector<128x128xbf16>, vector<16x128xf32> -> vector<16x128xf32>
    %c0_69 = arith.constant 0 : index
    %c0_70 = arith.constant 0 : index
    %97 = vector.load %arg9[%c0_69, %c0_70] : memref<1x128xf32, #tpu.memory_space<vmem>>, vector<1x128xf32>
    %c0_71 = arith.constant 0 : index
    %c0_72 = arith.constant 0 : index
    %98 = vector.load %arg10[%c0_71, %c0_72] : memref<1x128xf32, #tpu.memory_space<vmem>>, vector<1x128xf32>
    %cst_73 = arith.constant dense<0.000000e+00> : vector<128xf32>
    %99 = vector.multi_reduction <add>, %96, %cst_73 [0] : vector<16x128xf32> to vector<128xf32>
    %100 = vector.shape_cast %99 : vector<128xf32> to vector<1x128xf32>
    %101 = arith.mulf %96, %96 : vector<16x128xf32>
    %cst_74 = arith.constant dense<0.000000e+00> : vector<128xf32>
    %102 = vector.multi_reduction <add>, %101, %cst_74 [0] : vector<16x128xf32> to vector<128xf32>
    %103 = vector.shape_cast %102 : vector<128xf32> to vector<1x128xf32>
    %cst_75 = arith.constant 6.250000e-02 : f32
    %104 = vector.broadcast %cst_75 : f32 to vector<1x128xf32>
    %105 = arith.mulf %100, %104 : vector<1x128xf32>
    %cst_76 = arith.constant 6.250000e-02 : f32
    %106 = vector.broadcast %cst_76 : f32 to vector<1x128xf32>
    %107 = arith.mulf %103, %106 : vector<1x128xf32>
    %108 = arith.mulf %105, %105 : vector<1x128xf32>
    %109 = arith.subf %107, %108 : vector<1x128xf32>
    %cst_77 = arith.constant 0.000000e+00 : f32
    %110 = vector.broadcast %cst_77 : f32 to vector<1x128xf32>
    %111 = arith.maximumf %109, %110 : vector<1x128xf32>
    %cst_78 = arith.constant 9.99999974E-6 : f32
    %112 = vector.broadcast %cst_78 : f32 to vector<1x128xf32>
    %113 = arith.addf %111, %112 : vector<1x128xf32>
    %114 = math.rsqrt %113 : vector<1x128xf32>
    %115 = arith.mulf %97, %114 : vector<1x128xf32>
    %116 = arith.mulf %105, %115 : vector<1x128xf32>
    %117 = arith.subf %98, %116 : vector<1x128xf32>
    %118 = vector.broadcast %115 : vector<1x128xf32> to vector<16x128xf32>
    %119 = arith.mulf %96, %118 : vector<16x128xf32>
    %120 = vector.broadcast %117 : vector<1x128xf32> to vector<16x128xf32>
    %121 = arith.addf %119, %120 : vector<16x128xf32>
    %122 = arith.addf %93, %121 : vector<16x128xf32>
    %cst_79 = arith.constant 0.000000e+00 : f32
    %123 = vector.broadcast %cst_79 : f32 to vector<16x128xf32>
    %124 = arith.maximumf %122, %123 : vector<16x128xf32>
    %125 = vector.shape_cast %124 : vector<16x128xf32> to vector<2x8x128xf32>
    %c0_80 = arith.constant 0 : index
    %c0_81 = arith.constant 0 : index
    %c0_82 = arith.constant 0 : index
    %126 = vector.load %arg11[%c0_80, %c0_81, %c0_82] : memref<2x8x128xf32, #tpu.memory_space<vmem>>, vector<2x8x128xf32>
    tpu.vector_store %arg11[%c0_80, %c0_81, %c0_82], %125 {strides = array<i32>} : memref<2x8x128xf32, #tpu.memory_space<vmem>>, vector<2x8x128xf32>,
    return
  }
  func.func @transform_0(%arg0: i32) -> (i32, i32, i32, i32) {
    %c0_i32 = arith.constant 0 : i32
    %c0_i32_0 = arith.constant 0 : i32
    %c0_i32_1 = arith.constant 0 : i32
    %c0_i32_2 = arith.constant 0 : i32
    %c0_i32_3 = arith.constant 0 : i32
    return %c0_i32, %c0_i32_0, %c0_i32_1, %c0_i32_2 : i32, i32, i32, i32
  }
  func.func @transform_1(%arg0: i32) -> (i32, i32, i32) {
    %c0_i32 = arith.constant 0 : i32
    %c0_i32_0 = arith.constant 0 : i32
    %c0_i32_1 = arith.constant 0 : i32
    %c0_i32_2 = arith.constant 0 : i32
    return %c0_i32, %c0_i32_0, %c0_i32_1 : i32, i32, i32
  }
  func.func @transform_2(%arg0: i32) -> (i32, i32) {
    %c0_i32 = arith.constant 0 : i32
    %c0_i32_0 = arith.constant 0 : i32
    %c0_i32_1 = arith.constant 0 : i32
    return %c0_i32, %c0_i32_0 : i32, i32
  }
  func.func @transform_3(%arg0: i32) -> (i32, i32) {
    %c0_i32 = arith.constant 0 : i32
    %c0_i32_0 = arith.constant 0 : i32
    %c0_i32_1 = arith.constant 0 : i32
    return %c0_i32, %c0_i32_0 : i32, i32
  }
  func.func @transform_4(%arg0: i32) -> (i32, i32, i32) {
    %c0_i32 = arith.constant 0 : i32
    %c0_i32_0 = arith.constant 0 : i32
    %c0_i32_1 = arith.constant 0 : i32
    %c0_i32_2 = arith.constant 0 : i32
    return %c0_i32, %c0_i32_0, %c0_i32_1 : i32, i32, i32
  }
  func.func @transform_5(%arg0: i32) -> (i32, i32) {
    %c0_i32 = arith.constant 0 : i32
    %c0_i32_0 = arith.constant 0 : i32
    %c0_i32_1 = arith.constant 0 : i32
    return %c0_i32, %c0_i32_0 : i32, i32
  }
  func.func @transform_6(%arg0: i32) -> (i32, i32) {
    %c0_i32 = arith.constant 0 : i32
    %c0_i32_0 = arith.constant 0 : i32
    %c0_i32_1 = arith.constant 0 : i32
    return %c0_i32, %c0_i32_0 : i32, i32
  }
  func.func @transform_7(%arg0: i32) -> (i32, i32) {
    %c0_i32 = arith.constant 0 : i32
    %c0_i32_0 = arith.constant 0 : i32
    %c0_i32_1 = arith.constant 0 : i32
    return %c0_i32, %c0_i32_0 : i32, i32
  }
  func.func @transform_8(%arg0: i32) -> (i32, i32) {
    %c0_i32 = arith.constant 0 : i32
    %c0_i32_0 = arith.constant 0 : i32
    %c0_i32_1 = arith.constant 0 : i32
    return %c0_i32, %c0_i32_0 : i32, i32
  }
  func.func @transform_9(%arg0: i32) -> (i32, i32) {
    %c0_i32 = arith.constant 0 : i32
    %c0_i32_0 = arith.constant 0 : i32
    %c0_i32_1 = arith.constant 0 : i32
    return %c0_i32, %c0_i32_0 : i32, i32
  }
  func.func @transform_10(%arg0: i32) -> (i32, i32, i32) {
    %c0_i32 = arith.constant 0 : i32
    %c0_i32_0 = arith.constant 0 : i32
    %c0_i32_1 = arith.constant 0 : i32
    %c0_i32_2 = arith.constant 0 : i32
    return %c0_i32, %c0_i32_0, %c0_i32_1 : i32, i32, i32
  }
}

</mosaic_0001>

<llo_original>
// kernel: tpu_custom_call.1
$region0: #{tpu_custom_call.1}
  #allocation0 [shape = 'u32[]', space=smem, size = 0x4, offset = 0x4, fixed_abs, tag = 'smem constant byte address 0x4 - core index']
  #allocation1 [shape = 'u32[144,128]{1,0:T(1,128)}', space=vmem, size = 0x12000, scoped, tag = 'internal scratch']
  #allocation2 [shape = 'bf16[2,40,128]{2,1,0:T(8,128)(2,1)}', space=vmem, size = 0x5000, scoped, tag = 'scratch operand']
  %s0 = inlined_call_operand.vmem [shape: bf16[2,2,9,128], index: 0, kind: input, shape index: {}]
  %s1 = inlined_call_operand.hbm [shape: bf16[3,128,128], index: 1, kind: input, shape index: {}]
  %s2 = inlined_call_operand.vmem [shape: f32[1,128], index: 2, kind: input, shape index: {}]
  %s3 = inlined_call_operand.vmem [shape: f32[1,128], index: 3, kind: input, shape index: {}]
  %s4 = inlined_call_operand.hbm [shape: bf16[3,128,128], index: 4, kind: input, shape index: {}]
  %s5 = inlined_call_operand.vmem [shape: f32[1,128], index: 5, kind: input, shape index: {}]
  %s6 = inlined_call_operand.vmem [shape: f32[1,128], index: 6, kind: input, shape index: {}]
  %s7 = inlined_call_operand.vmem [shape: bf16[128,128], index: 7, kind: input, shape index: {}]
  %s8 = inlined_call_operand.vmem [shape: f32[1,128], index: 8, kind: input, shape index: {}]
  %s9 = inlined_call_operand.vmem [shape: f32[1,128], index: 9, kind: input, shape index: {}]
  %s10 = inlined_call_operand.hbm [shape: f32[2,8,128], index: 10, kind: output, shape index: {}]
  %s11 = sld [smem:[#allocation0]]
  $region58: #{tpu_custom_call.1} parent=0
    _
  %s13 = ssub.s32 1, %s11
  %s14 = scalar_select 0, %s13, %s11
  $region1: #{tpu_custom_call.1} parent=0
    #allocation3 [shape = 'u8[98304]{0}', space=vmem, size = 0x18000, scoped, tag = 'input window, operand 1, single buffered']
    #allocation4 [shape = 's32[1]{0}', space=sflag, size = 0x4, scoped, tag = 'scoped memory for tpu_custom_call.1']
    #allocation5 [shape = 's32[1]{0}', space=sflag, size = 0x4, scoped, tag = 'scoped memory for tpu_custom_call.1']
    #allocation6 [shape = 'u8[98304]{0}', space=vmem, size = 0x18000, scoped, tag = 'input window, operand 4, single buffered']
    #allocation7 [shape = 's32[1]{0}', space=sflag, size = 0x4, scoped, tag = 'scoped memory for tpu_custom_call.1']
    #allocation8 [shape = 'u8[8192]{0}', space=vmem, size = 0x2000, scoped, tag = 'output window, operand 0, single buffered']
    %15 = vsyncpa [#allocation4], 0
    %16 = vsyncpa [#allocation7], 0
    %17 = vsyncpa [#allocation5], 0
    // Predicated region
    $region2: #{tpu_custom_call.1} parent=1 // pred_check
      _
    $region3: #{tpu_custom_call.1} parent=1 // pred_check_branch
      %19 = sbr.rel (0) target = $region5
    $region4: #{tpu_custom_call.1} parent=1 // pred_region
      _
    $region5: #{tpu_custom_call.1} parent=1 // pred_fallthru
      _
    // Predicated region
    $region6: #{tpu_custom_call.1} parent=1 // pred_check
      _
    $region7: #{tpu_custom_call.1} parent=1 // pred_check_branch
      %21 = sbr.rel (0) target = $region9
    $region8: #{tpu_custom_call.1} parent=1 // pred_region
      %s23 = ssub.s32 3072, 3072
      %24 = vsyncadd [#allocation4], %s23
      %s25 = sshll.u32 [#allocation3], 4
      %s26 = int_to_ptr.vmem [resolvable:$true] %s25
      %31 = dma.hbm_to_vmem [thread:$0]  %s1, 3072, %s26, [#allocation4], 64, 64, 4
    $region9: #{tpu_custom_call.1} parent=1 // pred_fallthru
      _
    // Predicated region
    $region10: #{tpu_custom_call.1} parent=1 // pred_check
      _
    $region11: #{tpu_custom_call.1} parent=1 // pred_check_branch
      %33 = sbr.rel (0) target = $region13
    $region12: #{tpu_custom_call.1} parent=1 // pred_region
      _
    $region13: #{tpu_custom_call.1} parent=1 // pred_fallthru
      _
    // Predicated region
    $region14: #{tpu_custom_call.1} parent=1 // pred_check
      _
    $region15: #{tpu_custom_call.1} parent=1 // pred_check_branch
      %35 = sbr.rel (0) target = $region17
    $region16: #{tpu_custom_call.1} parent=1 // pred_region
      _
    $region17: #{tpu_custom_call.1} parent=1 // pred_fallthru
      _
    // Predicated region
    $region18: #{tpu_custom_call.1} parent=1 // pred_check
      _
    $region19: #{tpu_custom_call.1} parent=1 // pred_check_branch
      %37 = sbr.rel (0) target = $region21
    $region20: #{tpu_custom_call.1} parent=1 // pred_region
      %s39 = ssub.s32 3072, 3072
      %40 = vsyncadd [#allocation7], %s39
      %s41 = sshll.u32 [#allocation6], 4
      %s42 = int_to_ptr.vmem [resolvable:$true] %s41
      %47 = dma.hbm_to_vmem [thread:$0]  %s4, 3072, %s42, [#allocation7], 64, 64, 4
    $region21: #{tpu_custom_call.1} parent=1 // pred_fallthru
      _
    // Predicated region
    $region22: #{tpu_custom_call.1} parent=1 // pred_check
      _
    $region23: #{tpu_custom_call.1} parent=1 // pred_check_branch
      %49 = sbr.rel (0) target = $region25
    $region24: #{tpu_custom_call.1} parent=1 // pred_region
      _
    $region25: #{tpu_custom_call.1} parent=1 // pred_fallthru
      _
    // Predicated region
    $region26: #{tpu_custom_call.1} parent=1 // pred_check
      _
    $region27: #{tpu_custom_call.1} parent=1 // pred_check_branch
      %51 = sbr.rel (0) target = $region29
    $region28: #{tpu_custom_call.1} parent=1 // pred_region
      _
    $region29: #{tpu_custom_call.1} parent=1 // pred_fallthru
      _
    // Predicated region
    $region30: #{tpu_custom_call.1} parent=1 // pred_check
      _
    $region31: #{tpu_custom_call.1} parent=1 // pred_check_branch
      %53 = sbr.rel (0) target = $region33
    $region32: #{tpu_custom_call.1} parent=1 // pred_region
      _
    $region33: #{tpu_custom_call.1} parent=1 // pred_fallthru
      _
    // Predicated region
    $region34: #{tpu_custom_call.1} parent=1 // pred_check
      _
    $region35: #{tpu_custom_call.1} parent=1 // pred_check_branch
      %55 = sbr.rel (0) target = $region37
    $region36: #{tpu_custom_call.1} parent=1 // pred_region
      _
    $region37: #{tpu_custom_call.1} parent=1 // pred_fallthru
      _
    // Predicated region
    $region38: #{tpu_custom_call.1} parent=1 // pred_check
      _
    $region39: #{tpu_custom_call.1} parent=1 // pred_check_branch
      %57 = sbr.rel (0) target = $region41
    $region40: #{tpu_custom_call.1} parent=1 // pred_region
      _
    $region41: #{tpu_custom_call.1} parent=1 // pred_fallthru
      _
    // Predicated region
    $region42: #{tpu_custom_call.1} parent=1 // pred_check
      _
    $region43: #{tpu_custom_call.1} parent=1 // pred_check_branch
      %59 = sbr.rel (0) target = $region45
    $region44: #{tpu_custom_call.1} parent=1 // pred_region
      %60 = dma.done [#allocation4], 3072
    $region45: #{tpu_custom_call.1} parent=1 // pred_fallthru
      _
    // Predicated region
    $region46: #{tpu_custom_call.1} parent=1 // pred_check
      _
    $region47: #{tpu_custom_call.1} parent=1 // pred_check_branch
      %62 = sbr.rel (0) target = $region49
    $region48: #{tpu_custom_call.1} parent=1 // pred_region
      %63 = dma.done [#allocation7], 3072
    $region49: #{tpu_custom_call.1} parent=1 // pred_fallthru
      _
    %s65 = scalar_lea.vmem %s0, 16
    %v66 = vld [vmem:[%s65] sm:$0xf]
    %v67 = vld [vmem:[%s65 + $0x8] sm:$0xf]
    %v68 = vld [vmem:[%s0] sm:$0xf]
    %v69 = vld [vmem:[%s0 + $0x8] sm:$0xf]
    %v70 = vld [vmem:[#allocation3] sm:$0xf]
    %v71 = vld [vmem:[#allocation3 + $0x4] sm:$0xf]
    %v72 = vld [vmem:[#allocation3 + $0x8] sm:$0xf]
    %v73 = vld [vmem:[#allocation3 + $0xc] sm:$0xf]
    %v74 = vld [vmem:[#allocation3 + $0x10] sm:$0xf]
    %v75 = vld [vmem:[#allocation3 + $0x14] sm:$0xf]
    %v76 = vld [vmem:[#allocation3 + $0x18] sm:$0xf]
    %v77 = vld [vmem:[#allocation3 + $0x1c] sm:$0xf]
    %v78 = vld [vmem:[#allocation3 + $0x20] sm:$0xf]
    %v79 = vld [vmem:[#allocation3 + $0x24] sm:$0xf]
    %v80 = vld [vmem:[#allocation3 + $0x28] sm:$0xf]
    %v81 = vld [vmem:[#allocation3 + $0x2c] sm:$0xf]
    %v82 = vld [vmem:[#allocation3 + $0x30] sm:$0xf]
    %v83 = vld [vmem:[#allocation3 + $0x34] sm:$0xf]
    %v84 = vld [vmem:[#allocation3 + $0x38] sm:$0xf]
    %v85 = vld [vmem:[#allocation3 + $0x3c] sm:$0xf]
    %s86 = scalar_lea.vmem [#allocation3], 64
    %v87 = vld [vmem:[%s86] sm:$0xf]
    %v88 = vld [vmem:[%s86 + $0x4] sm:$0xf]
    %v89 = vld [vmem:[%s86 + $0x8] sm:$0xf]
    %v90 = vld [vmem:[%s86 + $0xc] sm:$0xf]
    %v91 = vld [vmem:[%s86 + $0x10] sm:$0xf]
    %v92 = vld [vmem:[%s86 + $0x14] sm:$0xf]
    %v93 = vld [vmem:[%s86 + $0x18] sm:$0xf]
    %v94 = vld [vmem:[%s86 + $0x1c] sm:$0xf]
    %v95 = vld [vmem:[%s86 + $0x20] sm:$0xf]
    %v96 = vld [vmem:[%s86 + $0x24] sm:$0xf]
    %v97 = vld [vmem:[%s86 + $0x28] sm:$0xf]
    %v98 = vld [vmem:[%s86 + $0x2c] sm:$0xf]
    %v99 = vld [vmem:[%s86 + $0x30] sm:$0xf]
    %v100 = vld [vmem:[%s86 + $0x34] sm:$0xf]
    %v101 = vld [vmem:[%s86 + $0x38] sm:$0xf]
    %v102 = vld [vmem:[%s86 + $0x3c] sm:$0xf]
    %v105 = vunpack.c.l.b16 %v66
    %v106 = vunpack.c.l.b16 %v67
    %v107 = vpack.c.b16 %v106, %v105
    %v125 = vunpack.c.l.b16 %v87
    %v126 = vunpack.c.l.b16 %v88
    %v127 = vunpack.c.l.b16 %v89
    %v128 = vunpack.c.l.b16 %v90
    %v129 = vunpack.c.l.b16 %v91
    %v130 = vunpack.c.l.b16 %v92
    %v131 = vunpack.c.l.b16 %v93
    %v132 = vunpack.c.l.b16 %v94
    %v133 = vunpack.c.l.b16 %v95
    %v134 = vunpack.c.l.b16 %v96
    %v135 = vunpack.c.l.b16 %v97
    %v136 = vunpack.c.l.b16 %v98
    %v137 = vunpack.c.l.b16 %v99
    %v138 = vunpack.c.l.b16 %v100
    %v139 = vunpack.c.l.b16 %v101
    %v140 = vunpack.c.l.b16 %v102
    %v141 = vpack.c.b16 %v126, %v125
    %v142 = vpack.c.b16 %v128, %v127
    %v143 = vpack.c.b16 %v130, %v129
    %v144 = vpack.c.b16 %v132, %v131
    %v145 = vpack.c.b16 %v134, %v133
    %v146 = vpack.c.b16 %v136, %v135
    %v147 = vpack.c.b16 %v138, %v137
    %v148 = vpack.c.b16 %v140, %v139
    %157 = vmatprep.subr.bf16.mxu0 0
    %158 = vmatpush1.bf16.msra.mxu0 %v141
    %159 = vmatprep.subr.bf16.mxu0 0
    %160 = vmatpush1.bf16.msra.mxu0 %v142
    %161 = vmatprep.subr.bf16.mxu0 0
    %162 = vmatpush1.bf16.msra.mxu0 %v143
    %163 = vmatprep.subr.bf16.mxu0 0
    %164 = vmatpush1.bf16.msra.mxu0 %v144
    %165 = vmatprep.subr.bf16.mxu0 0
    %166 = vmatpush1.bf16.msra.mxu0 %v145
    %167 = vmatprep.subr.bf16.mxu0 0
    %168 = vmatpush1.bf16.msra.mxu0 %v146
    %169 = vmatprep.subr.bf16.mxu0 0
    %170 = vmatpush1.bf16.msra.mxu0 %v147
    %171 = vmatprep.subr.bf16.mxu0 0
    %172 = vmatpush1.bf16.msra.mxu0 %v148
    %173 = vmatprep.subr.bf16.mxu0 0
    %174 = vmatpush1.bf16.msra.mxu0 0
    %175 = vmatprep.subr.bf16.mxu0 0
    %176 = vmatpush1.bf16.msra.mxu0 0
    %177 = vmatprep.subr.bf16.mxu0 0
    %178 = vmatpush1.bf16.msra.mxu0 0
    %179 = vmatprep.subr.bf16.mxu0 0
    %180 = vmatpush1.bf16.msra.mxu0 0
    %181 = vmatprep.subr.bf16.mxu0 0
    %182 = vmatpush1.bf16.msra.mxu0 0
    %183 = vmatprep.subr.bf16.mxu0 0
    %184 = vmatpush1.bf16.msra.mxu0 0
    %185 = vmatprep.subr.bf16.mxu0 0
    %186 = vmatpush1.bf16.msra.mxu0 0
    %187 = vmatprep.subr.bf16.mxu0 0
    %188 = vmatpush1.bf16.msra.mxu0 0
    %189 = vmatprep.mubr.bf16.mxu0 0
    %190 = vmatmul.mubr.bf16.gmra.mrb[0].mxu0 %v107
    %v191 = vpop.f32.mrb[0].mxu0
    %v192 = vadd.f32 0.0, %v191
    %v193 = vpop.f32.mrb[0].mxu0
    %v194 = vpop.f32.mrb[0].mxu0
    %v195 = vadd.f32 0.0, %v194
    %v196 = vpop.f32.mrb[0].mxu0
    %197 = vdwg.mxu0
    %v200 = vunpack.c.l.b16 %v68
    %v201 = vunpack.c.l.b16 %v69
    %v202 = vpack.c.b16 %v201, %v200
    %v220 = vunpack.c.l.b16 %v70
    %v221 = vunpack.c.l.b16 %v71
    %v222 = vunpack.c.l.b16 %v72
    %v223 = vunpack.c.l.b16 %v73
    %v224 = vunpack.c.l.b16 %v74
    %v225 = vunpack.c.l.b16 %v75
    %v226 = vunpack.c.l.b16 %v76
    %v227 = vunpack.c.l.b16 %v77
    %v228 = vunpack.c.l.b16 %v78
    %v229 = vunpack.c.l.b16 %v79
    %v230 = vunpack.c.l.b16 %v80
    %v231 = vunpack.c.l.b16 %v81
    %v232 = vunpack.c.l.b16 %v82
    %v233 = vunpack.c.l.b16 %v83
    %v234 = vunpack.c.l.b16 %v84
    %v235 = vunpack.c.l.b16 %v85
    %v236 = vpack.c.b16 %v221, %v220
    %v237 = vpack.c.b16 %v223, %v222
    %v238 = vpack.c.b16 %v225, %v224
    %v239 = vpack.c.b16 %v227, %v226
    %v240 = vpack.c.b16 %v229, %v228
    %v241 = vpack.c.b16 %v231, %v230
    %v242 = vpack.c.b16 %v233, %v232
    %v243 = vpack.c.b16 %v235, %v234
    %252 = vmatprep.subr.bf16.mxu0 0
    %253 = vmatpush1.bf16.msra.mxu0 %v236
    %254 = vmatprep.subr.bf16.mxu0 0
    %255 = vmatpush1.bf16.msra.mxu0 %v237
    %256 = vmatprep.subr.bf16.mxu0 0
    %257 = vmatpush1.bf16.msra.mxu0 %v238
    %258 = vmatprep.subr.bf16.mxu0 0
    %259 = vmatpush1.bf16.msra.mxu0 %v239
    %260 = vmatprep.subr.bf16.mxu0 0
    %261 = vmatpush1.bf16.msra.mxu0 %v240
    %262 = vmatprep.subr.bf16.mxu0 0
    %263 = vmatpush1.bf16.msra.mxu0 %v241
    %264 = vmatprep.subr.bf16.mxu0 0
    %265 = vmatpush1.bf16.msra.mxu0 %v242
    %266 = vmatprep.subr.bf16.mxu0 0
    %267 = vmatpush1.bf16.msra.mxu0 %v243
    %268 = vmatprep.subr.bf16.mxu0 0
    %269 = vmatpush1.bf16.msra.mxu0 0
    %270 = vmatprep.subr.bf16.mxu0 0
    %271 = vmatpush1.bf16.msra.mxu0 0
    %272 = vmatprep.subr.bf16.mxu0 0
    %273 = vmatpush1.bf16.msra.mxu0 0
    %274 = vmatprep.subr.bf16.mxu0 0
    %275 = vmatpush1.bf16.msra.mxu0 0
    %276 = vmatprep.subr.bf16.mxu0 0
    %277 = vmatpush1.bf16.msra.mxu0 0
    %278 = vmatprep.subr.bf16.mxu0 0
    %279 = vmatpush1.bf16.msra.mxu0 0
    %280 = vmatprep.subr.bf16.mxu0 0
    %281 = vmatpush1.bf16.msra.mxu0 0
    %282 = vmatprep.subr.bf16.mxu0 0
    %283 = vmatpush1.bf16.msra.mxu0 0
    %284 = vmatprep.mubr.bf16.mxu0 0
    %285 = vmatmul.mubr.bf16.gmra.mrb[0].mxu0 %v202
    %v286 = vpop.f32.mrb[0].mxu0
    %v287 = vadd.f32 %v192, %v286
    %v288 = vpop.f32.mrb[0].mxu0
    %v289 = vpop.f32.mrb[0].mxu0
    %v290 = vadd.f32 %v195, %v289
    %v291 = vpop.f32.mrb[0].mxu0
    %292 = vdwg.mxu0
    %v293 = vld [vmem:[%s0] sm:$0xf]
    %v294 = vld [vmem:[%s0 + $0x4] sm:$0x1]
    %v295 = vld [vmem:[%s0 + $0x8] sm:$0xf]
    %v296 = vld [vmem:[%s0 + $0xc] sm:$0x1]
    %vm297 = vsmask.f32 3328
    %vm298 = vsmask.f32 7440
    %vm299 = vmor %vm297, %vm298
    %v301 = vshrl.u32 %v293, 16
    %v303 = vrot.slane %v301, 4
    %v304 = vshll.u32 %v293, 16
    %v306 = vrot.slane %v304, 5
    %v307 = vor.u32 %v303, %v306
    %v308 = vrot.slane %v307, 4
    %v310 = vshll.u32 %v294, 16
    %v312 = vrot.slane %v310, 5
    %v313 = vsel %vm299, %v308, %v312
    %v315 = vshrl.u32 %v295, 16
    %v317 = vrot.slane %v315, 4
    %v318 = vshll.u32 %v295, 16
    %v320 = vrot.slane %v318, 5
    %v321 = vor.u32 %v317, %v320
    %v322 = vrot.slane %v321, 4
    %v324 = vshll.u32 %v296, 16
    %v326 = vrot.slane %v324, 5
    %v327 = vsel %vm299, %v322, %v326
    %s328 = scalar_lea.vmem [#allocation3], 128
    %v329 = vld [vmem:[%s328] sm:$0xf]
    %v330 = vld [vmem:[%s328 + $0x4] sm:$0xf]
    %v331 = vld [vmem:[%s328 + $0x8] sm:$0xf]
    %v332 = vld [vmem:[%s328 + $0xc] sm:$0xf]
    %v333 = vld [vmem:[%s328 + $0x10] sm:$0xf]
    %v334 = vld [vmem:[%s328 + $0x14] sm:$0xf]
    %v335 = vld [vmem:[%s328 + $0x18] sm:$0xf]
    %v336 = vld [vmem:[%s328 + $0x1c] sm:$0xf]
    %v337 = vld [vmem:[%s328 + $0x20] sm:$0xf]
    %v338 = vld [vmem:[%s328 + $0x24] sm:$0xf]
    %v339 = vld [vmem:[%s328 + $0x28] sm:$0xf]
    %v340 = vld [vmem:[%s328 + $0x2c] sm:$0xf]
    %v341 = vld [vmem:[%s328 + $0x30] sm:$0xf]
    %v342 = vld [vmem:[%s328 + $0x34] sm:$0xf]
    %v343 = vld [vmem:[%s328 + $0x38] sm:$0xf]
    %v344 = vld [vmem:[%s328 + $0x3c] sm:$0xf]
    %v345 = vunpack.c.l.b16 %v313
    %v346 = vunpack.c.l.b16 %v327
    %v347 = vpack.c.b16 %v346, %v345
    %v365 = vunpack.c.l.b16 %v329
    %v366 = vunpack.c.l.b16 %v330
    %v367 = vunpack.c.l.b16 %v331
    %v368 = vunpack.c.l.b16 %v332
    %v369 = vunpack.c.l.b16 %v333
    %v370 = vunpack.c.l.b16 %v334
    %v371 = vunpack.c.l.b16 %v335
    %v372 = vunpack.c.l.b16 %v336
    %v373 = vunpack.c.l.b16 %v337
    %v374 = vunpack.c.l.b16 %v338
    %v375 = vunpack.c.l.b16 %v339
    %v376 = vunpack.c.l.b16 %v340
    %v377 = vunpack.c.l.b16 %v341
    %v378 = vunpack.c.l.b16 %v342
    %v379 = vunpack.c.l.b16 %v343
    %v380 = vunpack.c.l.b16 %v344
    %v381 = vpack.c.b16 %v366, %v365
    %v382 = vpack.c.b16 %v368, %v367
    %v383 = vpack.c.b16 %v370, %v369
    %v384 = vpack.c.b16 %v372, %v371
    %v385 = vpack.c.b16 %v374, %v373
    %v386 = vpack.c.b16 %v376, %v375
    %v387 = vpack.c.b16 %v378, %v377
    %v388 = vpack.c.b16 %v380, %v379
    %397 = vmatprep.subr.bf16.mxu0 0
    %398 = vmatpush1.bf16.msra.mxu0 %v381
    %399 = vmatprep.subr.bf16.mxu0 0
    %400 = vmatpush1.bf16.msra.mxu0 %v382
    %401 = vmatprep.subr.bf16.mxu0 0
    %402 = vmatpush1.bf16.msra.mxu0 %v383
    %403 = vmatprep.subr.bf16.mxu0 0
    %404 = vmatpush1.bf16.msra.mxu0 %v384
    %405 = vmatprep.subr.bf16.mxu0 0
    %406 = vmatpush1.bf16.msra.mxu0 %v385
    %407 = vmatprep.subr.bf16.mxu0 0
    %408 = vmatpush1.bf16.msra.mxu0 %v386
    %409 = vmatprep.subr.bf16.mxu0 0
    %410 = vmatpush1.bf16.msra.mxu0 %v387
    %411 = vmatprep.subr.bf16.mxu0 0
    %412 = vmatpush1.bf16.msra.mxu0 %v388
    %413 = vmatprep.subr.bf16.mxu0 0
    %414 = vmatpush1.bf16.msra.mxu0 0
    %415 = vmatprep.subr.bf16.mxu0 0
    %416 = vmatpush1.bf16.msra.mxu0 0
    %417 = vmatprep.subr.bf16.mxu0 0
    %418 = vmatpush1.bf16.msra.mxu0 0
    %419 = vmatprep.subr.bf16.mxu0 0
    %420 = vmatpush1.bf16.msra.mxu0 0
    %421 = vmatprep.subr.bf16.mxu0 0
    %422 = vmatpush1.bf16.msra.mxu0 0
    %423 = vmatprep.subr.bf16.mxu0 0
    %424 = vmatpush1.bf16.msra.mxu0 0
    %425 = vmatprep.subr.bf16.mxu0 0
    %426 = vmatpush1.bf16.msra.mxu0 0
    %427 = vmatprep.subr.bf16.mxu0 0
    %428 = vmatpush1.bf16.msra.mxu0 0
    %429 = vmatprep.mubr.bf16.mxu0 0
    %430 = vmatmul.mubr.bf16.gmra.mrb[0].mxu0 %v347
    %v431 = vpop.f32.mrb[0].mxu0
    %v432 = vadd.f32 0.0, %v431
    %v433 = vpop.f32.mrb[0].mxu0
    %v434 = vpop.f32.mrb[0].mxu0
    %v435 = vadd.f32 0.0, %v434
    %v436 = vpop.f32.mrb[0].mxu0
    %437 = vdwg.mxu0
    %v438 = vadd.f32 %v287, %v432
    %v439 = vadd.f32 %v290, %v435
    %v440 = vld [vmem:[%s2] sm:$0x1]
    %v441 = vld [vmem:[%s3] sm:$0x1]
    %v442 = vadd.f32 %v438, %v439
    %v443 = vrot.slane %v442, 4
    %v444 = vadd.f32 %v442, %v443
    %v445 = vrot.slane %v444, 2
    %v446 = vadd.f32 %v444, %v445
    %v447 = vrot.slane %v446, 1
    %v448 = vadd.f32 %v446, %v447
    %v449 = vmul.f32 %v438, %v438
    %v450 = vmul.f32 %v439, %v439
    %v451 = vadd.f32 %v449, %v450
    %v452 = vrot.slane %v451, 4
    %v453 = vadd.f32 %v451, %v452
    %v454 = vrot.slane %v453, 2
    %v455 = vadd.f32 %v453, %v454
    %v456 = vrot.slane %v455, 1
    %v457 = vadd.f32 %v455, %v456
    %v458 = vmul.f32 %v448, 0.0625
    %v459 = vmul.f32 %v457, 0.0625
    %v460 = vmul.f32 %v458, %v458
    %v461 = vsub.f32 %v459, %v460
    %v462 = vmax.f32 %v461, 0.0
    %v463 = vadd.f32 %v462, 1e-05
    %v464 = vrsqrt.pop %v463
    %v465 = vmul.f32 %v440, %v464
    %v466 = vmul.f32 %v458, %v465
    %v467 = vsub.f32 %v441, %v466
    %v469 = vlaneseq
    %v470 = vshrl.u32 %v469, 7
    %v471 = vsub.s32 0, %v470
    %v472 = vrot.slane %v465, %v471
    %v474 = vmul.f32 %v438, %v472
    %v475 = vmul.f32 %v439, %v472
    %v477 = vlaneseq
    %v478 = vshrl.u32 %v477, 7
    %v479 = vsub.s32 0, %v478
    %v480 = vrot.slane %v467, %v479
    %v482 = vadd.f32 %v474, %v480
    %v483 = vadd.f32 %v475, %v480
    %v484 = vmax.f32 %v482, 0.0
    %v485 = vmax.f32 %v483, 0.0
    %v486 = vpack.c.bf16 %v485, %v484
    %v488 = vunpack.c.l.b16 %v486
    %v489 = vunpack.c.h.b16 %v486
    %v490 = vpack.c.b16 %v488, %v488
    %v491 = vpack.c.b16 %v489, %v489
    %vm494 = vcmask 1043459
    %vm495 = vsmask.f32 7950
    %vm496 = vmand %vm494, %vm495
    %v497 = vld [vmem:[#allocation2 + $0x4] sm:$0x8]
    %v498 = vsel %vm496, 0, %v497
    %499 = vst [vmem:[#allocation2 + $0x4] sm:$0x8] %v498
    %v500 = vld [vmem:[#allocation2 + $0x18] sm:$0x8]
    %v501 = vsel %vm496, 0, %v500
    %502 = vst [vmem:[#allocation2 + $0x18] sm:$0x8] %v501
    %503 = vst [vmem:[#allocation2 + $0x8] sm:$0xf] %v490
    %504 = vst [vmem:[#allocation2 + $0x1c] sm:$0xf] %v491
    %vm505 = vcmask 1040384
    %vm506 = vsmask.f32 256
    %vm507 = vmand %vm505, %vm506
    %v508 = vld [vmem:[#allocation2 + $0xc] sm:$0x1]
    %v509 = vsel %vm507, 0, %v508
    %510 = vst [vmem:[#allocation2 + $0xc] sm:$0x1] %v509
    %v511 = vld [vmem:[#allocation2 + $0x20] sm:$0x1]
    %v512 = vsel %vm507, 0, %v511
    %513 = vst [vmem:[#allocation2 + $0x20] sm:$0x1] %v512
    %v514 = vld [vmem:[#allocation2 + $0x4] sm:$0x8]
    %v515 = vld [vmem:[#allocation2 + $0x8] sm:$0xf]
    %v516 = vld [vmem:[#allocation2 + $0x18] sm:$0x8]
    %v517 = vld [vmem:[#allocation2 + $0x1c] sm:$0xf]
    %vm518 = vsmask.f32 4368
    %vm519 = vmor %vm506, %vm518
    %v521 = vshrl.u32 %v514, 16
    %v523 = vrot.slane %v521, 7
    %v524 = vrot.slane %v523, 4
    %v526 = vshrl.u32 %v515, 16
    %v528 = vrot.slane %v526, 7
    %v529 = vshll.u32 %v515, 16
    %v531 = vor.u32 %v528, %v529
    %v532 = vsel %vm519, %v524, %v531
    %v534 = vshrl.u32 %v516, 16
    %v536 = vrot.slane %v534, 7
    %v537 = vrot.slane %v536, 4
    %v539 = vshrl.u32 %v517, 16
    %v541 = vrot.slane %v539, 7
    %v542 = vshll.u32 %v517, 16
    %v544 = vor.u32 %v541, %v542
    %v545 = vsel %vm519, %v537, %v544
    %v546 = vld [vmem:[#allocation2 + $0xc] sm:$0x1]
    %v547 = vld [vmem:[#allocation2 + $0x20] sm:$0x1]
    %v548 = vrot.slane %v526, 4
    %v549 = vrot.slane %v529, 5
    %v550 = vor.u32 %v548, %v549
    %v551 = vrot.slane %v550, 4
    %v553 = vshll.u32 %v546, 16
    %v555 = vrot.slane %v553, 5
    %v556 = vsel %vm299, %v551, %v555
    %v557 = vrot.slane %v539, 4
    %v558 = vrot.slane %v542, 5
    %v559 = vor.u32 %v557, %v558
    %v560 = vrot.slane %v559, 4
    %v562 = vshll.u32 %v547, 16
    %v564 = vrot.slane %v562, 5
    %v565 = vsel %vm299, %v560, %v564
    %v566 = vld [vmem:[#allocation6] sm:$0xf]
    %v567 = vld [vmem:[#allocation6 + $0x4] sm:$0xf]
    %v568 = vld [vmem:[#allocation6 + $0x8] sm:$0xf]
    %v569 = vld [vmem:[#allocation6 + $0xc] sm:$0xf]
    %v570 = vld [vmem:[#allocation6 + $0x10] sm:$0xf]
    %v571 = vld [vmem:[#allocation6 + $0x14] sm:$0xf]
    %v572 = vld [vmem:[#allocation6 + $0x18] sm:$0xf]
    %v573 = vld [vmem:[#allocation6 + $0x1c] sm:$0xf]
    %v574 = vld [vmem:[#allocation6 + $0x20] sm:$0xf]
    %v575 = vld [vmem:[#allocation6 + $0x24] sm:$0xf]
    %v576 = vld [vmem:[#allocation6 + $0x28] sm:$0xf]
    %v577 = vld [vmem:[#allocation6 + $0x2c] sm:$0xf]
    %v578 = vld [vmem:[#allocation6 + $0x30] sm:$0xf]
    %v579 = vld [vmem:[#allocation6 + $0x34] sm:$0xf]
    %v580 = vld [vmem:[#allocation6 + $0x38] sm:$0xf]
    %v581 = vld [vmem:[#allocation6 + $0x3c] sm:$0xf]
    %s582 = scalar_lea.vmem [#allocation6], 64
    %v583 = vld [vmem:[%s582] sm:$0xf]
    %v584 = vld [vmem:[%s582 + $0x4] sm:$0xf]
    %v585 = vld [vmem:[%s582 + $0x8] sm:$0xf]
    %v586 = vld [vmem:[%s582 + $0xc] sm:$0xf]
    %v587 = vld [vmem:[%s582 + $0x10] sm:$0xf]
    %v588 = vld [vmem:[%s582 + $0x14] sm:$0xf]
    %v589 = vld [vmem:[%s582 + $0x18] sm:$0xf]
    %v590 = vld [vmem:[%s582 + $0x1c] sm:$0xf]
    %v591 = vld [vmem:[%s582 + $0x20] sm:$0xf]
    %v592 = vld [vmem:[%s582 + $0x24] sm:$0xf]
    %v593 = vld [vmem:[%s582 + $0x28] sm:$0xf]
    %v594 = vld [vmem:[%s582 + $0x2c] sm:$0xf]
    %v595 = vld [vmem:[%s582 + $0x30] sm:$0xf]
    %v596 = vld [vmem:[%s582 + $0x34] sm:$0xf]
    %v597 = vld [vmem:[%s582 + $0x38] sm:$0xf]
    %v598 = vld [vmem:[%s582 + $0x3c] sm:$0xf]
    %v615 = vunpack.c.l.b16 %v583
    %v616 = vunpack.c.l.b16 %v584
    %v617 = vunpack.c.l.b16 %v585
    %v618 = vunpack.c.l.b16 %v586
    %v619 = vunpack.c.l.b16 %v587
    %v620 = vunpack.c.l.b16 %v588
    %v621 = vunpack.c.l.b16 %v589
    %v622 = vunpack.c.l.b16 %v590
    %v623 = vunpack.c.l.b16 %v591
    %v624 = vunpack.c.l.b16 %v592
    %v625 = vunpack.c.l.b16 %v593
    %v626 = vunpack.c.l.b16 %v594
    %v627 = vunpack.c.l.b16 %v595
    %v628 = vunpack.c.l.b16 %v596
    %v629 = vunpack.c.l.b16 %v597
    %v630 = vunpack.c.l.b16 %v598
    %v631 = vpack.c.b16 %v616, %v615
    %v632 = vpack.c.b16 %v618, %v617
    %v633 = vpack.c.b16 %v620, %v619
    %v634 = vpack.c.b16 %v622, %v621
    %v635 = vpack.c.b16 %v624, %v623
    %v636 = vpack.c.b16 %v626, %v625
    %v637 = vpack.c.b16 %v628, %v627
    %v638 = vpack.c.b16 %v630, %v629
    %647 = vmatprep.subr.bf16.mxu0 0
    %648 = vmatpush1.bf16.msra.mxu0 %v631
    %649 = vmatprep.subr.bf16.mxu0 0
    %650 = vmatpush1.bf16.msra.mxu0 %v632
    %651 = vmatprep.subr.bf16.mxu0 0
    %652 = vmatpush1.bf16.msra.mxu0 %v633
    %653 = vmatprep.subr.bf16.mxu0 0
    %654 = vmatpush1.bf16.msra.mxu0 %v634
    %655 = vmatprep.subr.bf16.mxu0 0
    %656 = vmatpush1.bf16.msra.mxu0 %v635
    %657 = vmatprep.subr.bf16.mxu0 0
    %658 = vmatpush1.bf16.msra.mxu0 %v636
    %659 = vmatprep.subr.bf16.mxu0 0
    %660 = vmatpush1.bf16.msra.mxu0 %v637
    %661 = vmatprep.subr.bf16.mxu0 0
    %662 = vmatpush1.bf16.msra.mxu0 %v638
    %663 = vmatprep.subr.bf16.mxu0 0
    %664 = vmatpush1.bf16.msra.mxu0 0
    %665 = vmatprep.subr.bf16.mxu0 0
    %666 = vmatpush1.bf16.msra.mxu0 0
    %667 = vmatprep.subr.bf16.mxu0 0
    %668 = vmatpush1.bf16.msra.mxu0 0
    %669 = vmatprep.subr.bf16.mxu0 0
    %670 = vmatpush1.bf16.msra.mxu0 0
    %671 = vmatprep.subr.bf16.mxu0 0
    %672 = vmatpush1.bf16.msra.mxu0 0
    %673 = vmatprep.subr.bf16.mxu0 0
    %674 = vmatpush1.bf16.msra.mxu0 0
    %675 = vmatprep.subr.bf16.mxu0 0
    %676 = vmatpush1.bf16.msra.mxu0 0
    %677 = vmatprep.subr.bf16.mxu0 0
    %678 = vmatpush1.bf16.msra.mxu0 0
    %679 = vmatprep.mubr.bf16.mxu0 0
    %680 = vmatmul.mubr.bf16.gmra.mrb[0].mxu0 %v486
    %v681 = vpop.f32.mrb[0].mxu0
    %v682 = vadd.f32 0.0, %v681
    %v683 = vpop.f32.mrb[0].mxu0
    %v684 = vpop.f32.mrb[0].mxu0
    %v685 = vadd.f32 0.0, %v684
    %v686 = vpop.f32.mrb[0].mxu0
    %687 = vdwg.mxu0
    %v688 = vunpack.c.l.b16 %v532
    %v689 = vunpack.c.l.b16 %v545
    %v690 = vpack.c.b16 %v689, %v688
    %v708 = vunpack.c.l.b16 %v566
    %v709 = vunpack.c.l.b16 %v567
    %v710 = vunpack.c.l.b16 %v568
    %v711 = vunpack.c.l.b16 %v569
    %v712 = vunpack.c.l.b16 %v570
    %v713 = vunpack.c.l.b16 %v571
    %v714 = vunpack.c.l.b16 %v572
    %v715 = vunpack.c.l.b16 %v573
    %v716 = vunpack.c.l.b16 %v574
    %v717 = vunpack.c.l.b16 %v575
    %v718 = vunpack.c.l.b16 %v576
    %v719 = vunpack.c.l.b16 %v577
    %v720 = vunpack.c.l.b16 %v578
    %v721 = vunpack.c.l.b16 %v579
    %v722 = vunpack.c.l.b16 %v580
    %v723 = vunpack.c.l.b16 %v581
    %v724 = vpack.c.b16 %v709, %v708
    %v725 = vpack.c.b16 %v711, %v710
    %v726 = vpack.c.b16 %v713, %v712
    %v727 = vpack.c.b16 %v715, %v714
    %v728 = vpack.c.b16 %v717, %v716
    %v729 = vpack.c.b16 %v719, %v718
    %v730 = vpack.c.b16 %v721, %v720
    %v731 = vpack.c.b16 %v723, %v722
    %740 = vmatprep.subr.bf16.mxu0 0
    %741 = vmatpush1.bf16.msra.mxu0 %v724
    %742 = vmatprep.subr.bf16.mxu0 0
    %743 = vmatpush1.bf16.msra.mxu0 %v725
    %744 = vmatprep.subr.bf16.mxu0 0
    %745 = vmatpush1.bf16.msra.mxu0 %v726
    %746 = vmatprep.subr.bf16.mxu0 0
    %747 = vmatpush1.bf16.msra.mxu0 %v727
    %748 = vmatprep.subr.bf16.mxu0 0
    %749 = vmatpush1.bf16.msra.mxu0 %v728
    %750 = vmatprep.subr.bf16.mxu0 0
    %751 = vmatpush1.bf16.msra.mxu0 %v729
    %752 = vmatprep.subr.bf16.mxu0 0
    %753 = vmatpush1.bf16.msra.mxu0 %v730
    %754 = vmatprep.subr.bf16.mxu0 0
    %755 = vmatpush1.bf16.msra.mxu0 %v731
    %756 = vmatprep.subr.bf16.mxu0 0
    %757 = vmatpush1.bf16.msra.mxu0 0
    %758 = vmatprep.subr.bf16.mxu0 0
    %759 = vmatpush1.bf16.msra.mxu0 0
    %760 = vmatprep.subr.bf16.mxu0 0
    %761 = vmatpush1.bf16.msra.mxu0 0
    %762 = vmatprep.subr.bf16.mxu0 0
    %763 = vmatpush1.bf16.msra.mxu0 0
    %764 = vmatprep.subr.bf16.mxu0 0
    %765 = vmatpush1.bf16.msra.mxu0 0
    %766 = vmatprep.subr.bf16.mxu0 0
    %767 = vmatpush1.bf16.msra.mxu0 0
    %768 = vmatprep.subr.bf16.mxu0 0
    %769 = vmatpush1.bf16.msra.mxu0 0
    %770 = vmatprep.subr.bf16.mxu0 0
    %771 = vmatpush1.bf16.msra.mxu0 0
    %772 = vmatprep.mubr.bf16.mxu0 0
    %773 = vmatmul.mubr.bf16.gmra.mrb[0].mxu0 %v690
    %v774 = vpop.f32.mrb[0].mxu0
    %v775 = vadd.f32 %v682, %v774
    %v776 = vpop.f32.mrb[0].mxu0
    %v777 = vpop.f32.mrb[0].mxu0
    %v778 = vadd.f32 %v685, %v777
    %v779 = vpop.f32.mrb[0].mxu0
    %780 = vdwg.mxu0
    %s781 = scalar_lea.vmem [#allocation6], 128
    %v782 = vld [vmem:[%s781] sm:$0xf]
    %v783 = vld [vmem:[%s781 + $0x4] sm:$0xf]
    %v784 = vld [vmem:[%s781 + $0x8] sm:$0xf]
    %v785 = vld [vmem:[%s781 + $0xc] sm:$0xf]
    %v786 = vld [vmem:[%s781 + $0x10] sm:$0xf]
    %v787 = vld [vmem:[%s781 + $0x14] sm:$0xf]
    %v788 = vld [vmem:[%s781 + $0x18] sm:$0xf]
    %v789 = vld [vmem:[%s781 + $0x1c] sm:$0xf]
    %v790 = vld [vmem:[%s781 + $0x20] sm:$0xf]
    %v791 = vld [vmem:[%s781 + $0x24] sm:$0xf]
    %v792 = vld [vmem:[%s781 + $0x28] sm:$0xf]
    %v793 = vld [vmem:[%s781 + $0x2c] sm:$0xf]
    %v794 = vld [vmem:[%s781 + $0x30] sm:$0xf]
    %v795 = vld [vmem:[%s781 + $0x34] sm:$0xf]
    %v796 = vld [vmem:[%s781 + $0x38] sm:$0xf]
    %v797 = vld [vmem:[%s781 + $0x3c] sm:$0xf]
    %v798 = vunpack.c.l.b16 %v556
    %v799 = vunpack.c.l.b16 %v565
    %v800 = vpack.c.b16 %v799, %v798
    %v818 = vunpack.c.l.b16 %v782
    %v819 = vunpack.c.l.b16 %v783
    %v820 = vunpack.c.l.b16 %v784
    %v821 = vunpack.c.l.b16 %v785
    %v822 = vunpack.c.l.b16 %v786
    %v823 = vunpack.c.l.b16 %v787
    %v824 = vunpack.c.l.b16 %v788
    %v825 = vunpack.c.l.b16 %v789
    %v826 = vunpack.c.l.b16 %v790
    %v827 = vunpack.c.l.b16 %v791
    %v828 = vunpack.c.l.b16 %v792
    %v829 = vunpack.c.l.b16 %v793
    %v830 = vunpack.c.l.b16 %v794
    %v831 = vunpack.c.l.b16 %v795
    %v832 = vunpack.c.l.b16 %v796
    %v833 = vunpack.c.l.b16 %v797
    %v834 = vpack.c.b16 %v819, %v818
    %v835 = vpack.c.b16 %v821, %v820
    %v836 = vpack.c.b16 %v823, %v822
    %v837 = vpack.c.b16 %v825, %v824
    %v838 = vpack.c.b16 %v827, %v826
    %v839 = vpack.c.b16 %v829, %v828
    %v840 = vpack.c.b16 %v831, %v830
    %v841 = vpack.c.b16 %v833, %v832
    %850 = vmatprep.subr.bf16.mxu0 0
    %851 = vmatpush1.bf16.msra.mxu0 %v834
    %852 = vmatprep.subr.bf16.mxu0 0
    %853 = vmatpush1.bf16.msra.mxu0 %v835
    %854 = vmatprep.subr.bf16.mxu0 0
    %855 = vmatpush1.bf16.msra.mxu0 %v836
    %856 = vmatprep.subr.bf16.mxu0 0
    %857 = vmatpush1.bf16.msra.mxu0 %v837
    %858 = vmatprep.subr.bf16.mxu0 0
    %859 = vmatpush1.bf16.msra.mxu0 %v838
    %860 = vmatprep.subr.bf16.mxu0 0
    %861 = vmatpush1.bf16.msra.mxu0 %v839
    %862 = vmatprep.subr.bf16.mxu0 0
    %863 = vmatpush1.bf16.msra.mxu0 %v840
    %864 = vmatprep.subr.bf16.mxu0 0
    %865 = vmatpush1.bf16.msra.mxu0 %v841
    %866 = vmatprep.subr.bf16.mxu0 0
    %867 = vmatpush1.bf16.msra.mxu0 0
    %868 = vmatprep.subr.bf16.mxu0 0
    %869 = vmatpush1.bf16.msra.mxu0 0
    %870 = vmatprep.subr.bf16.mxu0 0
    %871 = vmatpush1.bf16.msra.mxu0 0
    %872 = vmatprep.subr.bf16.mxu0 0
    %873 = vmatpush1.bf16.msra.mxu0 0
    %874 = vmatprep.subr.bf16.mxu0 0
    %875 = vmatpush1.bf16.msra.mxu0 0
    %876 = vmatprep.subr.bf16.mxu0 0
    %877 = vmatpush1.bf16.msra.mxu0 0
    %878 = vmatprep.subr.bf16.mxu0 0
    %879 = vmatpush1.bf16.msra.mxu0 0
    %880 = vmatprep.subr.bf16.mxu0 0
    %881 = vmatpush1.bf16.msra.mxu0 0
    %882 = vmatprep.mubr.bf16.mxu0 0
    %883 = vmatmul.mubr.bf16.gmra.mrb[0].mxu0 %v800
    %v884 = vpop.f32.mrb[0].mxu0
    %v885 = vadd.f32 0.0, %v884
    %v886 = vpop.f32.mrb[0].mxu0
    %v887 = vpop.f32.mrb[0].mxu0
    %v888 = vadd.f32 0.0, %v887
    %v889 = vpop.f32.mrb[0].mxu0
    %890 = vdwg.mxu0
    %v891 = vadd.f32 %v775, %v885
    %v892 = vadd.f32 %v778, %v888
    %v893 = vld [vmem:[%s5] sm:$0x1]
    %v894 = vld [vmem:[%s6] sm:$0x1]
    %v895 = vadd.f32 %v891, %v892
    %v896 = vrot.slane %v895, 4
    %v897 = vadd.f32 %v895, %v896
    %v898 = vrot.slane %v897, 2
    %v899 = vadd.f32 %v897, %v898
    %v900 = vrot.slane %v899, 1
    %v901 = vadd.f32 %v899, %v900
    %v902 = vmul.f32 %v891, %v891
    %v903 = vmul.f32 %v892, %v892
    %v904 = vadd.f32 %v902, %v903
    %v905 = vrot.slane %v904, 4
    %v906 = vadd.f32 %v904, %v905
    %v907 = vrot.slane %v906, 2
    %v908 = vadd.f32 %v906, %v907
    %v909 = vrot.slane %v908, 1
    %v910 = vadd.f32 %v908, %v909
    %v911 = vmul.f32 %v901, 0.0625
    %v912 = vmul.f32 %v910, 0.0625
    %v913 = vmul.f32 %v911, %v911
    %v914 = vsub.f32 %v912, %v913
    %v915 = vmax.f32 %v914, 0.0
    %v916 = vadd.f32 %v915, 1e-05
    %v917 = vrsqrt.pop %v916
    %v918 = vmul.f32 %v893, %v917
    %v919 = vmul.f32 %v911, %v918
    %v920 = vsub.f32 %v894, %v919
    %v922 = vlaneseq
    %v923 = vshrl.u32 %v922, 7
    %v924 = vsub.s32 0, %v923
    %v925 = vrot.slane %v918, %v924
    %v927 = vmul.f32 %v891, %v925
    %v928 = vmul.f32 %v892, %v925
    %v930 = vlaneseq
    %v931 = vshrl.u32 %v930, 7
    %v932 = vsub.s32 0, %v931
    %v933 = vrot.slane %v920, %v932
    %v935 = vadd.f32 %v927, %v933
    %v936 = vadd.f32 %v928, %v933
    %v937 = vld [vmem:[%s7] sm:$0xf]
    %v938 = vld [vmem:[%s7 + $0x4] sm:$0xf]
    %v939 = vld [vmem:[%s7 + $0x8] sm:$0xf]
    %v940 = vld [vmem:[%s7 + $0xc] sm:$0xf]
    %v941 = vld [vmem:[%s7 + $0x10] sm:$0xf]
    %v942 = vld [vmem:[%s7 + $0x14] sm:$0xf]
    %v943 = vld [vmem:[%s7 + $0x18] sm:$0xf]
    %v944 = vld [vmem:[%s7 + $0x1c] sm:$0xf]
    %v945 = vld [vmem:[%s7 + $0x20] sm:$0xf]
    %v946 = vld [vmem:[%s7 + $0x24] sm:$0xf]
    %v947 = vld [vmem:[%s7 + $0x28] sm:$0xf]
    %v948 = vld [vmem:[%s7 + $0x2c] sm:$0xf]
    %v949 = vld [vmem:[%s7 + $0x30] sm:$0xf]
    %v950 = vld [vmem:[%s7 + $0x34] sm:$0xf]
    %v951 = vld [vmem:[%s7 + $0x38] sm:$0xf]
    %v952 = vld [vmem:[%s7 + $0x3c] sm:$0xf]
    %v969 = vunpack.c.l.b16 %v937
    %v970 = vunpack.c.l.b16 %v938
    %v971 = vunpack.c.l.b16 %v939
    %v972 = vunpack.c.l.b16 %v940
    %v973 = vunpack.c.l.b16 %v941
    %v974 = vunpack.c.l.b16 %v942
    %v975 = vunpack.c.l.b16 %v943
    %v976 = vunpack.c.l.b16 %v944
    %v977 = vunpack.c.l.b16 %v945
    %v978 = vunpack.c.l.b16 %v946
    %v979 = vunpack.c.l.b16 %v947
    %v980 = vunpack.c.l.b16 %v948
    %v981 = vunpack.c.l.b16 %v949
    %v982 = vunpack.c.l.b16 %v950
    %v983 = vunpack.c.l.b16 %v951
    %v984 = vunpack.c.l.b16 %v952
    %v985 = vpack.c.b16 %v970, %v969
    %v986 = vpack.c.b16 %v972, %v971
    %v987 = vpack.c.b16 %v974, %v973
    %v988 = vpack.c.b16 %v976, %v975
    %v989 = vpack.c.b16 %v978, %v977
    %v990 = vpack.c.b16 %v980, %v979
    %v991 = vpack.c.b16 %v982, %v981
    %v992 = vpack.c.b16 %v984, %v983
    %1001 = vmatprep.subr.bf16.mxu0 0
    %1002 = vmatpush1.bf16.msra.mxu0 %v985
    %1003 = vmatprep.subr.bf16.mxu0 0
    %1004 = vmatpush1.bf16.msra.mxu0 %v986
    %1005 = vmatprep.subr.bf16.mxu0 0
    %1006 = vmatpush1.bf16.msra.mxu0 %v987
    %1007 = vmatprep.subr.bf16.mxu0 0
    %1008 = vmatpush1.bf16.msra.mxu0 %v988
    %1009 = vmatprep.subr.bf16.mxu0 0
    %1010 = vmatpush1.bf16.msra.mxu0 %v989
    %1011 = vmatprep.subr.bf16.mxu0 0
    %1012 = vmatpush1.bf16.msra.mxu0 %v990
    %1013 = vmatprep.subr.bf16.mxu0 0
    %1014 = vmatpush1.bf16.msra.mxu0 %v991
    %1015 = vmatprep.subr.bf16.mxu0 0
    %1016 = vmatpush1.bf16.msra.mxu0 %v992
    %1017 = vmatprep.subr.bf16.mxu0 0
    %1018 = vmatpush1.bf16.msra.mxu0 0
    %1019 = vmatprep.subr.bf16.mxu0 0
    %1020 = vmatpush1.bf16.msra.mxu0 0
    %1021 = vmatprep.subr.bf16.mxu0 0
    %1022 = vmatpush1.bf16.msra.mxu0 0
    %1023 = vmatprep.subr.bf16.mxu0 0
    %1024 = vmatpush1.bf16.msra.mxu0 0
    %1025 = vmatprep.subr.bf16.mxu0 0
    %1026 = vmatpush1.bf16.msra.mxu0 0
    %1027 = vmatprep.subr.bf16.mxu0 0
    %1028 = vmatpush1.bf16.msra.mxu0 0
    %1029 = vmatprep.subr.bf16.mxu0 0
    %1030 = vmatpush1.bf16.msra.mxu0 0
    %1031 = vmatprep.subr.bf16.mxu0 0
    %1032 = vmatpush1.bf16.msra.mxu0 0
    %1033 = vmatprep.mubr.bf16.mxu0 0
    %1034 = vmatmul.mubr.bf16.gmra.mrb[0].mxu0 %v107
    %v1035 = vpop.f32.mrb[0].mxu0
    %v1036 = vadd.f32 0.0, %v1035
    %v1037 = vpop.f32.mrb[0].mxu0
    %v1038 = vpop.f32.mrb[0].mxu0
    %v1039 = vadd.f32 0.0, %v1038
    %v1040 = vpop.f32.mrb[0].mxu0
    %1041 = vdwg.mxu0
    %v1042 = vld [vmem:[%s8] sm:$0x1]
    %v1043 = vld [vmem:[%s9] sm:$0x1]
    %v1044 = vadd.f32 %v1036, %v1039
    %v1045 = vrot.slane %v1044, 4
    %v1046 = vadd.f32 %v1044, %v1045
    %v1047 = vrot.slane %v1046, 2
    %v1048 = vadd.f32 %v1046, %v1047
    %v1049 = vrot.slane %v1048, 1
    %v1050 = vadd.f32 %v1048, %v1049
    %v1051 = vmul.f32 %v1036, %v1036
    %v1052 = vmul.f32 %v1039, %v1039
    %v1053 = vadd.f32 %v1051, %v1052
    %v1054 = vrot.slane %v1053, 4
    %v1055 = vadd.f32 %v1053, %v1054
    %v1056 = vrot.slane %v1055, 2
    %v1057 = vadd.f32 %v1055, %v1056
    %v1058 = vrot.slane %v1057, 1
    %v1059 = vadd.f32 %v1057, %v1058
    %v1060 = vmul.f32 %v1050, 0.0625
    %v1061 = vmul.f32 %v1059, 0.0625
    %v1062 = vmul.f32 %v1060, %v1060
    %v1063 = vsub.f32 %v1061, %v1062
    %v1064 = vmax.f32 %v1063, 0.0
    %v1065 = vadd.f32 %v1064, 1e-05
    %v1066 = vrsqrt.pop %v1065
    %v1067 = vmul.f32 %v1042, %v1066
    %v1068 = vmul.f32 %v1060, %v1067
    %v1069 = vsub.f32 %v1043, %v1068
    %v1071 = vlaneseq
    %v1072 = vshrl.u32 %v1071, 7
    %v1073 = vsub.s32 0, %v1072
    %v1074 = vrot.slane %v1067, %v1073
    %v1076 = vmul.f32 %v1036, %v1074
    %v1077 = vmul.f32 %v1039, %v1074
    %v1079 = vlaneseq
    %v1080 = vshrl.u32 %v1079, 7
    %v1081 = vsub.s32 0, %v1080
    %v1082 = vrot.slane %v1069, %v1081
    %v1084 = vadd.f32 %v1076, %v1082
    %v1085 = vadd.f32 %v1077, %v1082
    %v1086 = vadd.f32 %v935, %v1084
    %v1087 = vadd.f32 %v936, %v1085
    %v1088 = vmax.f32 %v1086, 0.0
    %v1089 = vmax.f32 %v1087, 0.0
    %1090 = vst [vmem:[#allocation8] sm:$0xff] %v1088
    %1091 = vst [vmem:[#allocation8 + $0x8] sm:$0xff] %v1089
    // Predicated region
    $region50: #{tpu_custom_call.1} parent=1 // pred_check
      _
    $region51: #{tpu_custom_call.1} parent=1 // pred_check_branch
      %1093 = sbr.rel (0) target = $region53
    $region52: #{tpu_custom_call.1} parent=1 // pred_region
      %s1095 = ssub.s32 256, 256
      %1096 = vsyncadd [#allocation5], %s1095
      %s1097 = sshll.u32 [#allocation8], 4
      %s1098 = int_to_ptr.vmem [resolvable:$true] %s1097
      %1103 = dma.vmem_to_hbm [thread:$0]  %s1098, 256, %s10, [#allocation5], 128, 128, 8
    $region53: #{tpu_custom_call.1} parent=1 // pred_fallthru
      _
    // Predicated region
    $region54: #{tpu_custom_call.1} parent=1 // pred_check
      _
    $region55: #{tpu_custom_call.1} parent=1 // pred_check_branch
      %1105 = sbr.rel (0) target = $region57
    $region56: #{tpu_custom_call.1} parent=1 // pred_region
      %1106 = dma.done [#allocation5], 256
    $region57: #{tpu_custom_call.1} parent=1 // pred_fallthru
      _
    %1107 = vsyncpa [#allocation4], 1
    %1108 = vsyncpa [#allocation7], 1
    %1109 = vsyncpa [#allocation5], 1

</llo_original>
